<compile_context>
chip_gen: v5e
topology: v5e:2x2
jax: 0.10.0
libtpu: 0.0.40
codegen_flags: <defaults>
</compile_context>

<pallas_src>
import jax
import jax.numpy as jnp
from jax.experimental import pallas as pl
from jax.experimental.pallas import tpu as pltpu


def _round_up(n, m):
    return ((n + m - 1) // m) * m


def _leaky_relu(x, slope=0.2):
    return jnp.where(x > 0, x, slope * x)


def discriminator_kernel(x_ref, w1_ref, b1_ref, w2_ref, b2_ref, w3t_ref,
                         b3_ref, o_ref):
    # Layer 1: (T, 8) bf16 @ (8, 128) bf16 -> f32 accum, bias, LeakyReLU (f32).
    h1 = jnp.dot(x_ref[...], w1_ref[...], preferred_element_type=jnp.float32)
    h1 = _leaky_relu(h1 + b1_ref[...])

    # Layer 2: (T, 128) @ (128, 64); feed the MXU bf16, accumulate in f32.
    h2 = jnp.dot(h1.astype(jnp.bfloat16), w2_ref[...],
                 preferred_element_type=jnp.float32)
    h2 = _leaky_relu(h2 + b2_ref[...])

    # Layer 3: 64 -> 1 as a VPU broadcast-multiply + lane reduction
    # (frees the MXU; a 64x1 matmul would waste the systolic array).
    h3 = jnp.sum(h2 * w3t_ref[...], axis=-1, keepdims=True) + b3_ref[...]

    # Sigmoid via tanh so the transcendental rides the EUP slot.
    o_ref[...] = (0.5 * (jnp.tanh(0.5 * h3) + 1.0)).astype(o_ref.dtype)


def discriminator_forward(x, params, *, block_rows=4096,
                          input_dtype=jnp.bfloat16):
    """x: (B, input_size) float32; params: dict of f32 weights/biases.

    Weights are stored (in_features, out_features); biases as (1, out)."""
    w1 = params["w1"]
    b1 = params["b1"]
    w2 = params["w2"]
    b2 = params["b2"]
    w3 = params["w3"]
    b3 = params["b3"]

    B, in_features = x.shape
    num_classes = w3.shape[1]

    # Batch tile: multiple of 8 sublanes, capped at block_rows.
    tile = min(block_rows, _round_up(max(B, 1), 8))
    b_pad = _round_up(B, tile)
    if b_pad != B:
        x = jnp.pad(x, ((0, b_pad - B), (0, 0)))

    # bf16 input / weight streams for the MXU; biases + layer-3 row stay f32.
    x_in = x.astype(input_dtype)
    w1_in = w1.astype(input_dtype)
    w2_in = w2.astype(input_dtype)
    w3t = w3.T.astype(jnp.float32)            # (1, 64), consumed on the VPU
    b1_f = b1.astype(jnp.float32)
    b2_f = b2.astype(jnp.float32)
    b3_f = b3.astype(jnp.float32)

    grid = (b_pad // tile,)
    _const = lambda i: (0, 0)                 # params stay resident in VMEM

    out = pl.pallas_call(
        discriminator_kernel,
        out_shape=jax.ShapeDtypeStruct((b_pad, num_classes), jnp.float32),
        grid=grid,
        in_specs=[
            pl.BlockSpec((tile, in_features), lambda i: (i, 0)),  # x tile
            pl.BlockSpec(w1_in.shape, _const),
            pl.BlockSpec(b1_f.shape, _const),
            pl.BlockSpec(w2_in.shape, _const),
            pl.BlockSpec(b2_f.shape, _const),
            pl.BlockSpec(w3t.shape, _const),
            pl.BlockSpec(b3_f.shape, _const),
        ],
        out_specs=pl.BlockSpec((tile, num_classes), lambda i: (i, 0)),
        compiler_params=pltpu.CompilerParams(
            dimension_semantics=("parallel",),          # megacore on v7x
            vmem_limit_bytes=32 * 1024 * 1024,          # explicit v7x budget
        ),
    )(x_in, w1_in, b1_f, w2_in, b2_f, w3t, b3_f)

    return out[:B]


def init_params(key, input_size=8, num_classes=1):
    """Deterministic init matching PyTorch Linear's U(-1/sqrt(fan_in), .) scheme."""
    dims = [(input_size, 128), (128, 64), (64, num_classes)]
    params = {}
    for idx, (fan_in, fan_out) in enumerate(dims, start=1):
        key, kw, kb = jax.random.split(key, 3)
        bound = 1.0 / (fan_in ** 0.5)
        params[f"w{idx}"] = jax.random.uniform(
            kw, (fan_in, fan_out), jnp.float32, -bound, bound)
        params[f"b{idx}"] = jax.random.uniform(
            kb, (1, fan_out), jnp.float32, -bound, bound)
    return params


def reference_forward(x, params, input_dtype=jnp.bfloat16):
    """Pure-JAX reference mirroring the kernel's bf16-in / f32-accum recipe."""
    rd = lambda a: a.astype(input_dtype).astype(jnp.float32)
    h = rd(x) @ rd(params["w1"]) + params["b1"]
    h = jnp.where(h > 0, h, 0.2 * h)
    h = rd(h) @ rd(params["w2"]) + params["b2"]
    h = jnp.where(h > 0, h, 0.2 * h)
    h = h @ params["w3"] + params["b3"]
    return 0.5 * (jnp.tanh(0.5 * h) + 1.0)


def reference_forward_f32(x, params):
    """Full-f32 PyTorch-equivalent forward."""
    h = x @ params["w1"] + params["b1"]
    h = jnp.where(h > 0, h, 0.2 * h)
    h = h @ params["w2"] + params["b2"]
    h = jnp.where(h > 0, h, 0.2 * h)
    h = h @ params["w3"] + params["b3"]
    return jax.nn.sigmoid(h)


if __name__ == "__main__":
    key = jax.random.PRNGKey(0)
    key, kx = jax.random.split(key)

    batch, input_size, num_classes = 8, 8, 1
    x = jax.random.normal(kx, (batch, input_size), jnp.float32)
    params = init_params(key, input_size=input_size, num_classes=num_classes)

    # Small single-tile case.
    y = jax.block_until_ready(discriminator_forward(x, params))
    assert y.shape == (batch, num_classes)
    y_ref = reference_forward(x, params)
    y_f32 = reference_forward_f32(x, params)
    assert jnp.allclose(y, y_ref, atol=2e-3, rtol=2e-3)
    assert jnp.allclose(y, y_f32, atol=3e-2, rtol=3e-2)

    # Multi-tile case: non-divisible batch exercises padding + grid > 1 while
    # weights stay resident across grid steps.
    key, kx2 = jax.random.split(key)
    x2 = jax.random.normal(kx2, (1000, input_size), jnp.float32)
    y2 = jax.block_until_ready(
        discriminator_forward(x2, params, block_rows=256))
    assert y2.shape == (1000, num_classes)
    y2_ref = reference_forward(x2, params)
    assert jnp.allclose(y2, y2_ref, atol=2e-3, rtol=2e-3)

    print("KERNEL_OK")
</pallas_src>

<mosaic_0001>
module attributes {stable_mosaic.version = 11 : i64} {
  func.func @discriminator_kernel(%arg0: i32, %arg1: memref<8x8xbf16, #tpu.memory_space<vmem>>, %arg2: memref<8x128xbf16, #tpu.memory_space<vmem>>, %arg3: memref<1x128xf32, #tpu.memory_space<vmem>>, %arg4: memref<128x64xbf16, #tpu.memory_space<vmem>>, %arg5: memref<1x64xf32, #tpu.memory_space<vmem>>, %arg6: memref<1x64xf32, #tpu.memory_space<vmem>>, %arg7: memref<1x1xf32, #tpu.memory_space<vmem>>, %arg8: memref<8x1xf32, #tpu.memory_space<vmem>>) attributes {dimension_semantics = [#tpu.dimension_semantics<parallel>], iteration_bounds = array<i64: 1>, scalar_prefetch = 0 : i64, scratch_operands = 0 : i64, tpu.core_type = #tpu.core_type<tc>, window_params = [{transform_indices = @transform_0, window_bounds = array<i64: 8, 8>}, {pipeline_mode = #tpu.pipeline_mode<synchronous>, transform_indices = @transform_1, window_bounds = array<i64: 8, 128>}, {pipeline_mode = #tpu.pipeline_mode<synchronous>, transform_indices = @transform_2, window_bounds = array<i64: 1, 128>}, {pipeline_mode = #tpu.pipeline_mode<synchronous>, transform_indices = @transform_3, window_bounds = array<i64: 128, 64>}, {pipeline_mode = #tpu.pipeline_mode<synchronous>, transform_indices = @transform_4, window_bounds = array<i64: 1, 64>}, {pipeline_mode = #tpu.pipeline_mode<synchronous>, transform_indices = @transform_5, window_bounds = array<i64: 1, 64>}, {pipeline_mode = #tpu.pipeline_mode<synchronous>, transform_indices = @transform_6, window_bounds = array<i64: 1, 1>}, {transform_indices = @transform_7, window_bounds = array<i64: 8, 1>}]} {
    %c0 = arith.constant 0 : index
    %c0_0 = arith.constant 0 : index
    %0 = vector.load %arg1[%c0, %c0_0] : memref<8x8xbf16, #tpu.memory_space<vmem>>, vector<8x8xbf16>
    %c0_1 = arith.constant 0 : index
    %c0_2 = arith.constant 0 : index
    %1 = vector.load %arg2[%c0_1, %c0_2] : memref<8x128xbf16, #tpu.memory_space<vmem>>, vector<8x128xbf16>
    %cst = arith.constant dense<0.000000e+00> : vector<8x128xf32>
    %2 = tpu.matmul %0, %1, %cst {dimension_numbers = #tpu.dot_dimension_numbers<[1], [0], [0], [1], [0, 0, 1, 1], [], []>} : vector<8x8xbf16>, vector<8x128xbf16>, vector<8x128xf32> -> vector<8x128xf32>
    %c0_3 = arith.constant 0 : index
    %c0_4 = arith.constant 0 : index
    %3 = vector.load %arg3[%c0_3, %c0_4] : memref<1x128xf32, #tpu.memory_space<vmem>>, vector<1x128xf32>
    %4 = vector.broadcast %3 : vector<1x128xf32> to vector<8x128xf32>
    %5 = arith.addf %2, %4 : vector<8x128xf32>
    %cst_5 = arith.constant 0.000000e+00 : f32
    %6 = vector.broadcast %cst_5 : f32 to vector<8x128xf32>
    %7 = arith.cmpf ogt, %5, %6 : vector<8x128xf32>
    %cst_6 = arith.constant 2.000000e-01 : f32
    %8 = vector.broadcast %cst_6 : f32 to vector<8x128xf32>
    %9 = arith.mulf %8, %5 : vector<8x128xf32>
    %10 = arith.select %7, %5, %9 : vector<8x128xi1>, vector<8x128xf32>
    %11 = arith.truncf %10 : vector<8x128xf32> to vector<8x128xbf16>
    %c0_7 = arith.constant 0 : index
    %c0_8 = arith.constant 0 : index
    %12 = vector.load %arg4[%c0_7, %c0_8] : memref<128x64xbf16, #tpu.memory_space<vmem>>, vector<128x64xbf16>
    %cst_9 = arith.constant dense<0.000000e+00> : vector<8x64xf32>
    %13 = tpu.matmul %11, %12, %cst_9 {dimension_numbers = #tpu.dot_dimension_numbers<[1], [0], [0], [1], [0, 0, 1, 1], [], []>} : vector<8x128xbf16>, vector<128x64xbf16>, vector<8x64xf32> -> vector<8x64xf32>
    %c0_10 = arith.constant 0 : index
    %c0_11 = arith.constant 0 : index
    %14 = vector.load %arg5[%c0_10, %c0_11] : memref<1x64xf32, #tpu.memory_space<vmem>>, vector<1x64xf32>
    %15 = vector.broadcast %14 : vector<1x64xf32> to vector<8x64xf32>
    %16 = arith.addf %13, %15 : vector<8x64xf32>
    %cst_12 = arith.constant 0.000000e+00 : f32
    %17 = vector.broadcast %cst_12 : f32 to vector<8x64xf32>
    %18 = arith.cmpf ogt, %16, %17 : vector<8x64xf32>
    %cst_13 = arith.constant 2.000000e-01 : f32
    %19 = vector.broadcast %cst_13 : f32 to vector<8x64xf32>
    %20 = arith.mulf %19, %16 : vector<8x64xf32>
    %21 = arith.select %18, %16, %20 : vector<8x64xi1>, vector<8x64xf32>
    %c0_14 = arith.constant 0 : index
    %c0_15 = arith.constant 0 : index
    %22 = vector.load %arg6[%c0_14, %c0_15] : memref<1x64xf32, #tpu.memory_space<vmem>>, vector<1x64xf32>
    %23 = vector.broadcast %22 : vector<1x64xf32> to vector<8x64xf32>
    %24 = arith.mulf %21, %23 : vector<8x64xf32>
    %cst_16 = arith.constant dense<0.000000e+00> : vector<8xf32>
    %25 = vector.multi_reduction <add>, %24, %cst_16 [1] : vector<8x64xf32> to vector<8xf32>
    %26 = vector.shape_cast %25 : vector<8xf32> to vector<8x1xf32>
    %c0_17 = arith.constant 0 : index
    %c0_18 = arith.constant 0 : index
    %27 = vector.load %arg7[%c0_17, %c0_18] : memref<1x1xf32, #tpu.memory_space<vmem>>, vector<1x1xf32>
    %28 = vector.broadcast %27 : vector<1x1xf32> to vector<8x1xf32>
    %29 = arith.addf %26, %28 : vector<8x1xf32>
    %cst_19 = arith.constant 5.000000e-01 : f32
    %30 = vector.broadcast %cst_19 : f32 to vector<8x1xf32>
    %31 = arith.mulf %30, %29 : vector<8x1xf32>
    %32 = math.tanh %31 : vector<8x1xf32>
    %cst_20 = arith.constant 1.000000e+00 : f32
    %33 = vector.broadcast %cst_20 : f32 to vector<8x1xf32>
    %34 = arith.addf %32, %33 : vector<8x1xf32>
    %cst_21 = arith.constant 5.000000e-01 : f32
    %35 = vector.broadcast %cst_21 : f32 to vector<8x1xf32>
    %36 = arith.mulf %35, %34 : vector<8x1xf32>
    %c0_22 = arith.constant 0 : index
    %c0_23 = arith.constant 0 : index
    %37 = vector.load %arg8[%c0_22, %c0_23] : memref<8x1xf32, #tpu.memory_space<vmem>>, vector<8x1xf32>
    tpu.vector_store %arg8[%c0_22, %c0_23], %36 {strides = array<i32>} : memref<8x1xf32, #tpu.memory_space<vmem>>, vector<8x1xf32>,
    return
  }
  func.func @transform_0(%arg0: i32) -> (i32, i32) {
    %c0_i32 = arith.constant 0 : i32
    %c0_i32_0 = arith.constant 0 : i32
    return %arg0, %c0_i32 : i32, i32
  }
  func.func @transform_1(%arg0: i32) -> (i32, i32) {
    %c0_i32 = arith.constant 0 : i32
    %c0_i32_0 = arith.constant 0 : i32
    %c0_i32_1 = arith.constant 0 : i32
    return %c0_i32, %c0_i32_0 : i32, i32
  }
  func.func @transform_2(%arg0: i32) -> (i32, i32) {
    %c0_i32 = arith.constant 0 : i32
    %c0_i32_0 = arith.constant 0 : i32
    %c0_i32_1 = arith.constant 0 : i32
    return %c0_i32, %c0_i32_0 : i32, i32
  }
  func.func @transform_3(%arg0: i32) -> (i32, i32) {
    %c0_i32 = arith.constant 0 : i32
    %c0_i32_0 = arith.constant 0 : i32
    %c0_i32_1 = arith.constant 0 : i32
    return %c0_i32, %c0_i32_0 : i32, i32
  }
  func.func @transform_4(%arg0: i32) -> (i32, i32) {
    %c0_i32 = arith.constant 0 : i32
    %c0_i32_0 = arith.constant 0 : i32
    %c0_i32_1 = arith.constant 0 : i32
    return %c0_i32, %c0_i32_0 : i32, i32
  }
  func.func @transform_5(%arg0: i32) -> (i32, i32) {
    %c0_i32 = arith.constant 0 : i32
    %c0_i32_0 = arith.constant 0 : i32
    %c0_i32_1 = arith.constant 0 : i32
    return %c0_i32, %c0_i32_0 : i32, i32
  }
  func.func @transform_6(%arg0: i32) -> (i32, i32) {
    %c0_i32 = arith.constant 0 : i32
    %c0_i32_0 = arith.constant 0 : i32
    %c0_i32_1 = arith.constant 0 : i32
    return %c0_i32, %c0_i32_0 : i32, i32
  }
  func.func @transform_7(%arg0: i32) -> (i32, i32) {
    %c0_i32 = arith.constant 0 : i32
    %c0_i32_0 = arith.constant 0 : i32
    return %arg0, %c0_i32 : i32, i32
  }
}

</mosaic_0001>

<llo_original>
// kernel: tpu_custom_call.1
$region0: #{tpu_custom_call.1}
  #allocation0 [shape = 'u32[]', space=smem, size = 0x4, offset = 0x4, fixed_abs, tag = 'smem constant byte address 0x4 - core index']
  #allocation1 [shape = 'u32[72,128]{1,0:T(1,128)}', space=vmem, size = 0x9000, scoped, tag = 'internal scratch']
  #allocation2 [shape = 'f32[1,1]{1,0:T(1,128)S(1)}', space=vmem, size = 0x200, scoped, tag = 'scoped memory for tpu_custom_call.1']
  %s0 = inlined_call_operand.vmem [shape: bf16[8,8], index: 0, kind: input, shape index: {}]
  %s1 = inlined_call_operand.vmem [shape: bf16[8,128], index: 1, kind: input, shape index: {}]
  %s2 = inlined_call_operand.vmem [shape: f32[1,128], index: 2, kind: input, shape index: {}]
  %s3 = inlined_call_operand.vmem [shape: bf16[128,64], index: 3, kind: input, shape index: {}]
  %s4 = inlined_call_operand.vmem [shape: f32[1,64], index: 4, kind: input, shape index: {}]
  %s5 = inlined_call_operand.vmem [shape: f32[1,64], index: 5, kind: input, shape index: {}]
  %s6 = inlined_call_operand.<no memory space> [shape: f32[1,1], index: 6, kind: input, shape index: {}]
  %s7 = inlined_call_operand.vmem [shape: f32[8,1], index: 7, kind: output, shape index: {}]
  %s8 = sld [smem:[#allocation0]]
  $region38: #{tpu_custom_call.1} parent=0
    _
  %s10 = ssub.s32 1, %s8
  %s11 = scalar_select 0, %s10, %s8
  %v12 = vstv %s6
  %13 = vst [vmem:[#allocation2] sm:$0x1] %v12
  // Predicated region
  $region2: #{tpu_custom_call.1} parent=0 // pred_check
    _
  $region3: #{tpu_custom_call.1} parent=0 // pred_check_branch
    %15 = sbr.rel (0) target = $region5
  $region4: #{tpu_custom_call.1} parent=0 // pred_region
    _
  $region5: #{tpu_custom_call.1} parent=0 // pred_fallthru
    _
  // Predicated region
  $region6: #{tpu_custom_call.1} parent=0 // pred_check
    _
  $region7: #{tpu_custom_call.1} parent=0 // pred_check_branch
    %17 = sbr.rel (0) target = $region9
  $region8: #{tpu_custom_call.1} parent=0 // pred_region
    _
  $region9: #{tpu_custom_call.1} parent=0 // pred_fallthru
    _
  // Predicated region
  $region10: #{tpu_custom_call.1} parent=0 // pred_check
    _
  $region11: #{tpu_custom_call.1} parent=0 // pred_check_branch
    %19 = sbr.rel (0) target = $region13
  $region12: #{tpu_custom_call.1} parent=0 // pred_region
    _
  $region13: #{tpu_custom_call.1} parent=0 // pred_fallthru
    _
  // Predicated region
  $region14: #{tpu_custom_call.1} parent=0 // pred_check
    _
  $region15: #{tpu_custom_call.1} parent=0 // pred_check_branch
    %21 = sbr.rel (0) target = $region17
  $region16: #{tpu_custom_call.1} parent=0 // pred_region
    _
  $region17: #{tpu_custom_call.1} parent=0 // pred_fallthru
    _
  // Predicated region
  $region18: #{tpu_custom_call.1} parent=0 // pred_check
    _
  $region19: #{tpu_custom_call.1} parent=0 // pred_check_branch
    %23 = sbr.rel (0) target = $region21
  $region20: #{tpu_custom_call.1} parent=0 // pred_region
    _
  $region21: #{tpu_custom_call.1} parent=0 // pred_fallthru
    _
  // Predicated region
  $region22: #{tpu_custom_call.1} parent=0 // pred_check
    _
  $region23: #{tpu_custom_call.1} parent=0 // pred_check_branch
    %25 = sbr.rel (0) target = $region25
  $region24: #{tpu_custom_call.1} parent=0 // pred_region
    _
  $region25: #{tpu_custom_call.1} parent=0 // pred_fallthru
    _
  // Predicated region
  $region26: #{tpu_custom_call.1} parent=0 // pred_check
    _
  $region27: #{tpu_custom_call.1} parent=0 // pred_check_branch
    %27 = sbr.rel (0) target = $region29
  $region28: #{tpu_custom_call.1} parent=0 // pred_region
    _
  $region29: #{tpu_custom_call.1} parent=0 // pred_fallthru
    _
  %v29 = vld [vmem:[%s0] sm:$0xf]
  %v30 = vld [vmem:[%s1] sm:$0xf]
  %v31 = vld [vmem:[%s2] sm:$0x1]
  %v33 = vperm.slane %v31, 0
  %vm35 = vcmask 64512
  %v37 = vsel %vm35, %v29, 0
  %vm39 = vcmask 1043456
  %v41 = vsel %vm39, %v30, 0
  %43 = vmatpush.bf16.msra.mxu0 0
  %44 = vmatpush.bf16.msra.mxu0 0
  %45 = vmatpush.bf16.msra.mxu0 0
  %46 = vmatpush.bf16.msra.mxu0 0
  %47 = vmatpush.bf16.msra.mxu0 0
  %48 = vmatpush.bf16.msra.mxu0 0
  %49 = vmatpush.bf16.msra.mxu0 0
  %50 = vmatpush.bf16.msra.mxu0 %v41
  %51 = vmatmul.bf16.gmra.mxu0 %v37
  %v52 = vpop.f32.mrf.mxu0
  %v53 = vadd.f32 %v33, %v52
  %v54 = vpop.f32.mrf.mxu0
  %55 = vdwg.mxu0
  %vm56 = vcmp.gt.f32.partialorder %v53, 0.0
  %v57 = vmul.f32 %v53, 0.2
  %v58 = vsel %vm56, %v53, %v57
  %v59 = vpack.c.bf16 %v58, %v58
  %v60 = vld [vmem:[%s3] sm:$0xf]
  %v61 = vld [vmem:[%s3 + $0x4] sm:$0xf]
  %v62 = vld [vmem:[%s3 + $0x8] sm:$0xf]
  %v63 = vld [vmem:[%s3 + $0xc] sm:$0xf]
  %v64 = vld [vmem:[%s3 + $0x10] sm:$0xf]
  %v65 = vld [vmem:[%s3 + $0x14] sm:$0xf]
  %v66 = vld [vmem:[%s3 + $0x18] sm:$0xf]
  %v67 = vld [vmem:[%s3 + $0x1c] sm:$0xf]
  %v68 = vld [vmem:[%s3 + $0x20] sm:$0xf]
  %v69 = vld [vmem:[%s3 + $0x24] sm:$0xf]
  %v70 = vld [vmem:[%s3 + $0x28] sm:$0xf]
  %v71 = vld [vmem:[%s3 + $0x2c] sm:$0xf]
  %v72 = vld [vmem:[%s3 + $0x30] sm:$0xf]
  %v73 = vld [vmem:[%s3 + $0x34] sm:$0xf]
  %v74 = vld [vmem:[%s3 + $0x38] sm:$0xf]
  %v75 = vld [vmem:[%s3 + $0x3c] sm:$0xf]
  %v76 = vld [vmem:[%s4] sm:$0x1]
  %v78 = vperm.slane %v76, 0
  %v96 = vunpack.c.l.b16 %v60
  %v97 = vunpack.c.l.b16 %v61
  %v98 = vunpack.c.l.b16 %v62
  %v99 = vunpack.c.l.b16 %v63
  %v100 = vunpack.c.l.b16 %v64
  %v101 = vunpack.c.l.b16 %v65
  %v102 = vunpack.c.l.b16 %v66
  %v103 = vunpack.c.l.b16 %v67
  %v104 = vunpack.c.l.b16 %v68
  %v105 = vunpack.c.l.b16 %v69
  %v106 = vunpack.c.l.b16 %v70
  %v107 = vunpack.c.l.b16 %v71
  %v108 = vunpack.c.l.b16 %v72
  %v109 = vunpack.c.l.b16 %v73
  %v110 = vunpack.c.l.b16 %v74
  %v111 = vunpack.c.l.b16 %v75
  %v112 = vpack.c.b16 %v97, %v96
  %v113 = vpack.c.b16 %v99, %v98
  %v114 = vpack.c.b16 %v101, %v100
  %v115 = vpack.c.b16 %v103, %v102
  %v116 = vpack.c.b16 %v105, %v104
  %v117 = vpack.c.b16 %v107, %v106
  %v118 = vpack.c.b16 %v109, %v108
  %v119 = vpack.c.b16 %v111, %v110
  %128 = vmatpush.bf16.msra.mxu0 %v119
  %129 = vmatpush.bf16.msra.mxu0 %v118
  %130 = vmatpush.bf16.msra.mxu0 %v117
  %131 = vmatpush.bf16.msra.mxu0 %v116
  %132 = vmatpush.bf16.msra.mxu0 %v115
  %133 = vmatpush.bf16.msra.mxu0 %v114
  %134 = vmatpush.bf16.msra.mxu0 %v113
  %135 = vmatpush.bf16.msra.mxu0 %v112
  %136 = vmatmul.bf16.gmra.mxu0 %v59
  %v137 = vpop.f32.mrf.mxu0
  %v138 = vadd.f32 %v78, %v137
  %v139 = vpop.f32.mrf.mxu0
  %140 = vdwg.mxu0
  %vm141 = vcmp.gt.f32.partialorder %v138, 0.0
  %v142 = vmul.f32 %v138, 0.2
  %v143 = vsel %vm141, %v138, %v142
  %v144 = vld [vmem:[%s5] sm:$0x1]
  %v146 = vperm.slane %v144, 0
  %v148 = vmul.f32 %v143, %v146
  %vm149 = vcmask 523264
  %v150 = vsel %vm149, %v148, 0.0
  %151 = vadd.xlane.f32.xlu0 %v150
  %v152 = vpop.xlane.xlu0 %151
  %v153 = vld [vmem:[#allocation2] sm:$0x1]
  %v155 = vperm.slane %v153, 0
  %v157 = vadd.f32 %v152, %v155
  %v158 = vmul.f32 %v157, 0.5
  %v159 = vtanh.pop %v158
  %v160 = vadd.f32 %v159, 1.0
  %v161 = vmul.f32 %v160, 0.5
  %vm162 = vcmask 7168
  %163 = vst.msk [vmem:[%s7] sm:$0xff] %vm162, %v161
  // Predicated region
  $region30: #{tpu_custom_call.1} parent=0 // pred_check
    _
  $region31: #{tpu_custom_call.1} parent=0 // pred_check_branch
    %165 = sbr.rel (0) target = $region33
  $region32: #{tpu_custom_call.1} parent=0 // pred_region
    _
  $region33: #{tpu_custom_call.1} parent=0 // pred_fallthru
    _
  // Predicated region
  $region34: #{tpu_custom_call.1} parent=0 // pred_check
    _
  $region35: #{tpu_custom_call.1} parent=0 // pred_check_branch
    %167 = sbr.rel (0) target = $region37
  $region36: #{tpu_custom_call.1} parent=0 // pred_region
    _
  $region37: #{tpu_custom_call.1} parent=0 // pred_fallthru
    _

</llo_original>
